<compile_context>
chip_gen: v5e
topology: v5e:2x2
jax: 0.10.0
libtpu: 0.0.40
codegen_flags: <defaults>
</compile_context>

<pallas_src>
import functools

import jax
import jax.numpy as jnp
import numpy as np
from jax.experimental import pallas as pl
from jax.experimental.pallas import tpu as pltpu

BN_EPS = 1e-5


def _round_up(x, m):
    return -(-x // m) * m


# --------------------------------------------------------------------------
# Pass 1: global BatchNorm statistics (sum / sum-sq accumulated across batch
# tiles; batch is the lane axis).  Outputs are resident accumulators across
# the ("arbitrary") grid and converted to mean / rstd on the last step.
# --------------------------------------------------------------------------
def bn_stats_kernel(xsa_ref, mean_ref, rstd_ref, *, batch, state_size):
    i = pl.program_id(0)

    @pl.when(i == 0)
    def _():
        mean_ref[...] = jnp.zeros_like(mean_ref)   # running sum(x)
        rstd_ref[...] = jnp.zeros_like(rstd_ref)   # running sum(x*x)

    x = xsa_ref[:state_size, :]                    # (S, tb); padded cols are 0
    mean_ref[...] += jnp.sum(x, axis=1, keepdims=True)
    rstd_ref[...] += jnp.sum(x * x, axis=1, keepdims=True)

    @pl.when(i == pl.num_programs(0) - 1)
    def _():
        inv_b = jnp.float32(1.0 / batch)
        m = mean_ref[...] * inv_b
        v = rstd_ref[...] * inv_b - m * m          # biased variance (training BN)
        mean_ref[...] = m
        rstd_ref[...] = jax.lax.rsqrt(jnp.maximum(v, 0.0) + BN_EPS)


# --------------------------------------------------------------------------
# Pass 2: batch-tiled forward.  BN already folded into (w1t, b1); everything
# is (features, batch) so the batch stays lane-dense end-to-end.
# --------------------------------------------------------------------------
def critic_fwd_kernel(xsa_ref, w1t_ref, b1_ref, w2st_ref, w2at_ref, b2_ref,
                      w3_ref, b3_ref, out_ref, *, state_size):
    S = state_size
    st = xsa_ref[:S, :]                            # (S,  tb)
    at = xsa_ref[S:, :]                            # (A,  tb)

    # fcs1 (BN folded in) + relu : (F1, S) @ (S, tb) -> (F1, tb)
    xs = jnp.dot(w1t_ref[...], st, preferred_element_type=jnp.float32) + b1_ref[...]
    xs = jnp.maximum(xs, 0.0)

    # fc2 on cat(xs, action) decomposed: W2s @ xs + W2a @ action
    h = (jnp.dot(w2st_ref[...], xs, preferred_element_type=jnp.float32)
         + jnp.dot(w2at_ref[...], at, preferred_element_type=jnp.float32)
         + b2_ref[...])
    h = jnp.maximum(h, 0.0)                        # (F2, tb)

    # fc3: VPU multiply + sublane reduce -> lane-dense (1, tb) output row.
    out = jnp.sum(h * w3_ref[...], axis=0, keepdims=True) + b3_ref[...]
    out_ref[...] = out.astype(out_ref.dtype)


# --------------------------------------------------------------------------
# Wrapper
# --------------------------------------------------------------------------
def critic_forward(state, action, params, *, block_b=2048):
    B, S = state.shape
    A = action.shape[1]
    F1 = params["w1"].shape[1]
    F2 = params["w2s"].shape[1]

    # Batch tile lives on lanes -> multiple of 128.  Keep >= 2 grid steps when
    # the batch is big enough so the 'parallel' axis can use both v7x cores.
    b128 = _round_up(B, 128)
    tb = min(_round_up(block_b, 128), b128)
    if b128 <= tb and b128 >= 512:
        tb = _round_up(b128 // 2, 128)
    tb = max(tb, 128)
    b_pad = _round_up(B, tb)
    num_tiles = b_pad // tb

    # One fused input: (S+A, b_pad), batch on the lane axis (zero-padded).
    xsa = jnp.concatenate([state, action], axis=1)
    if b_pad != B:
        xsa = jnp.pad(xsa, ((0, b_pad - B), (0, 0)))
    xsa_t = xsa.T                                           # (S+A, b_pad)

    # ---- pass 1: global BN statistics ----
    mean, rstd = pl.pallas_call(
        functools.partial(bn_stats_kernel, batch=B, state_size=S),
        out_shape=(jax.ShapeDtypeStruct((S, 1), jnp.float32),
                   jax.ShapeDtypeStruct((S, 1), jnp.float32)),
        grid_spec=pltpu.PrefetchScalarGridSpec(
            num_scalar_prefetch=0,
            grid=(num_tiles,),
            in_specs=[pl.BlockSpec((S + A, tb), lambda i: (0, i))],
            out_specs=[pl.BlockSpec((S, 1), lambda i: (0, 0)),
                       pl.BlockSpec((S, 1), lambda i: (0, 0))]),
        compiler_params=pltpu.CompilerParams(
            dimension_semantics=("arbitrary",)),
    )(xsa_t)

    # ---- fold BatchNorm into fcs1 (tiny XLA ops between the two passes) ----
    gamma = params["gamma"].reshape(S, 1)
    beta = params["beta"].reshape(S, 1)
    scale = rstd * gamma                                    # (S, 1)
    shift = beta - mean * scale                             # (S, 1)
    w1t = params["w1"].T * scale.reshape(1, S)              # (F1, S)
    b1c = params["b1"].reshape(F1, 1) + params["w1"].T @ shift   # (F1, 1)
    w2st = params["w2s"].T                                  # (F2, F1)
    w2at = params["w2a"].T                                  # (F2, A)
    b2c = params["b2"].reshape(F2, 1)
    w3c = params["w3"].reshape(F2, 1)
    b3c = params["b3"].reshape(1, 1)

    flops = 2 * b_pad * (S * F1 + F1 * F2 + A * F2 + F2)
    bytes_accessed = (xsa_t.size * 4 + b_pad * 4
                      + (F1 * S + F1 + F2 * F1 + F2 * A + 2 * F2 + 1) * 4)
    cost = pl.CostEstimate(flops=int(flops), transcendentals=0,
                           bytes_accessed=int(bytes_accessed))

    const = lambda i: (0, 0)

    # ---- pass 2: tiled forward, lane-dense (1, tb) output blocks ----
    out_row = pl.pallas_call(
        functools.partial(critic_fwd_kernel, state_size=S),
        out_shape=jax.ShapeDtypeStruct((1, b_pad), jnp.float32),
        grid_spec=pltpu.PrefetchScalarGridSpec(
            num_scalar_prefetch=0,
            grid=(num_tiles,),
            in_specs=[
                pl.BlockSpec((S + A, tb), lambda i: (0, i)),  # fused state|action tile
                pl.BlockSpec((F1, S), const),                 # w1t (BN folded)
                pl.BlockSpec((F1, 1), const),                 # b1  (BN folded)
                pl.BlockSpec((F2, F1), const),                # w2s^T
                pl.BlockSpec((F2, A), const),                 # w2a^T
                pl.BlockSpec((F2, 1), const),                 # b2
                pl.BlockSpec((F2, 1), const),                 # w3 column
                pl.BlockSpec((1, 1), const),                  # b3
            ],
            out_specs=pl.BlockSpec((1, tb), lambda i: (0, i)),
        ),
        compiler_params=pltpu.CompilerParams(
            dimension_semantics=("parallel",)),               # both TCs on v7x
        cost_estimate=cost,
    )(xsa_t, w1t, b1c, w2st, w2at, b2c, w3c, b3c)

    return out_row[0, :B].reshape(B, 1)


# --------------------------------------------------------------------------
# Init + pure-JAX reference
# --------------------------------------------------------------------------
def init_params(key, state_size, action_size, fcs1_units=128, fc2_units=64):
    """Deterministic init mirroring Critic.reset_parameters shapes/scheme."""
    ks = jax.random.split(key, 8)

    lim1 = 1.0 / np.sqrt(fcs1_units)      # hidden_init uses weight.size()[0]
    w1 = jax.random.uniform(ks[0], (state_size, fcs1_units), jnp.float32, -lim1, lim1)
    b1 = jax.random.uniform(ks[1], (fcs1_units,), jnp.float32,
                            -1.0 / np.sqrt(state_size), 1.0 / np.sqrt(state_size))

    lim2 = 1.0 / np.sqrt(fc2_units)
    w2s = jax.random.uniform(ks[2], (fcs1_units, fc2_units), jnp.float32, -lim2, lim2)
    w2a = jax.random.uniform(ks[3], (action_size, fc2_units), jnp.float32, -lim2, lim2)
    fan2 = fcs1_units + action_size
    b2 = jax.random.uniform(ks[4], (fc2_units,), jnp.float32,
                            -1.0 / np.sqrt(fan2), 1.0 / np.sqrt(fan2))

    w3 = jax.random.uniform(ks[5], (fc2_units, 1), jnp.float32, -3e-3, 3e-3)
    b3 = jax.random.uniform(ks[6], (1,), jnp.float32,
                            -1.0 / np.sqrt(fc2_units), 1.0 / np.sqrt(fc2_units))

    gamma = jnp.ones((state_size,), jnp.float32)
    beta = jnp.zeros((state_size,), jnp.float32)

    return dict(w1=w1, b1=b1, w2s=w2s, w2a=w2a, b2=b2, w3=w3, b3=b3,
                gamma=gamma, beta=beta)


def reference_forward(state, action, p):
    """Pure-JAX f32 reference matching the PyTorch module (training-mode BN)."""
    mean = jnp.mean(state, axis=0, keepdims=True)
    var = jnp.mean((state - mean) ** 2, axis=0, keepdims=True)
    xn = (state - mean) * jax.lax.rsqrt(var + BN_EPS) * p["gamma"] + p["beta"]
    xs = jnp.maximum(xn @ p["w1"] + p["b1"], 0.0)
    h = jnp.maximum(xs @ p["w2s"] + action @ p["w2a"] + p["b2"], 0.0)
    return h @ p["w3"] + p["b3"]


if __name__ == "__main__":
    key = jax.random.PRNGKey(0)
    k_state, k_action, k_params, k_state2, k_action2 = jax.random.split(key, 5)

    B, STATE_SIZE, ACTION_SIZE = 8, 16, 8
    state = jax.random.normal(k_state, (B, STATE_SIZE), jnp.float32)
    action = jax.random.uniform(k_action, (B, ACTION_SIZE), jnp.float32, -1.0, 1.0)
    params = init_params(k_params, STATE_SIZE, ACTION_SIZE)

    out = jax.block_until_ready(critic_forward(state, action, params))
    assert out.shape == (B, 1)
    ref = reference_forward(state, action, params)
    np.testing.assert_allclose(np.asarray(out), np.asarray(ref),
                               rtol=3e-2, atol=3e-2)

    # Multi-tile path: global BN stats accumulated across 4 batch tiles,
    # padded batch, lane-dense output reassembled in the wrapper.
    B2 = 1000
    state2 = jax.random.normal(k_state2, (B2, STATE_SIZE), jnp.float32)
    action2 = jax.random.uniform(k_action2, (B2, ACTION_SIZE), jnp.float32, -1.0, 1.0)
    out2 = jax.block_until_ready(
        critic_forward(state2, action2, params, block_b=256))
    ref2 = reference_forward(state2, action2, params)
    np.testing.assert_allclose(np.asarray(out2), np.asarray(ref2),
                               rtol=3e-2, atol=3e-2)

    print("KERNEL_OK")
</pallas_src>

<mosaic_0001>
module attributes {stable_mosaic.version = 11 : i64} {
  func.func @bn_stats_kernel(%arg0: i32, %arg1: memref<24x128xf32, #tpu.memory_space<vmem>>, %arg2: memref<16x1xf32, #tpu.memory_space<vmem>>, %arg3: memref<16x1xf32, #tpu.memory_space<vmem>>) attributes {dimension_semantics = [#tpu.dimension_semantics<arbitrary>], iteration_bounds = array<i64: 1>, scalar_prefetch = 0 : i64, scratch_operands = 0 : i64, tpu.core_type = #tpu.core_type<tc>, window_params = [{transform_indices = @transform_0, window_bounds = array<i64: 24, 128>}, {pipeline_mode = #tpu.pipeline_mode<synchronous>, transform_indices = @transform_1, window_bounds = array<i64: 16, 1>}, {pipeline_mode = #tpu.pipeline_mode<synchronous>, transform_indices = @transform_2, window_bounds = array<i64: 16, 1>}]} {
    %c0_i32 = arith.constant 0 : i32
    %0 = arith.cmpi eq, %arg0, %c0_i32 : i32
    %1 = arith.extui %0 : i1 to i32
    %c0_i32_0 = arith.constant 0 : i32
    %2 = arith.cmpi ne, %1, %c0_i32_0 : i32
    scf.if %2 {
      %cst_13 = arith.constant 0.000000e+00 : f32
      %18 = vector.broadcast %cst_13 : f32 to vector<16x1xf32>
      %c0_14 = arith.constant 0 : index
      %c0_15 = arith.constant 0 : index
      %19 = vector.load %arg2[%c0_14, %c0_15] : memref<16x1xf32, #tpu.memory_space<vmem>>, vector<16x1xf32>
      tpu.vector_store %arg2[%c0_14, %c0_15], %18 {strides = array<i32>} : memref<16x1xf32, #tpu.memory_space<vmem>>, vector<16x1xf32>,
      %cst_16 = arith.constant 0.000000e+00 : f32
      %20 = vector.broadcast %cst_16 : f32 to vector<16x1xf32>
      %c0_17 = arith.constant 0 : index
      %c0_18 = arith.constant 0 : index
      %21 = vector.load %arg3[%c0_17, %c0_18] : memref<16x1xf32, #tpu.memory_space<vmem>>, vector<16x1xf32>
      tpu.vector_store %arg3[%c0_17, %c0_18], %20 {strides = array<i32>} : memref<16x1xf32, #tpu.memory_space<vmem>>, vector<16x1xf32>,
    } else {
    }
    %c0 = arith.constant 0 : index
    %c0_1 = arith.constant 0 : index
    %3 = vector.load %arg1[%c0, %c0_1] : memref<24x128xf32, #tpu.memory_space<vmem>>, vector<16x128xf32>
    %c0_2 = arith.constant 0 : index
    %c0_3 = arith.constant 0 : index
    %4 = vector.load %arg2[%c0_2, %c0_3] : memref<16x1xf32, #tpu.memory_space<vmem>>, vector<16x1xf32>
    %cst = arith.constant dense<0.000000e+00> : vector<16xf32>
    %5 = vector.multi_reduction <add>, %3, %cst [1] : vector<16x128xf32> to vector<16xf32>
    %6 = vector.shape_cast %5 : vector<16xf32> to vector<16x1xf32>
    %7 = arith.addf %4, %6 : vector<16x1xf32>
    %c0_4 = arith.constant 0 : index
    %c0_5 = arith.constant 0 : index
    %8 = vector.load %arg2[%c0_4, %c0_5] : memref<16x1xf32, #tpu.memory_space<vmem>>, vector<16x1xf32>
    tpu.vector_store %arg2[%c0_4, %c0_5], %7 {strides = array<i32>} : memref<16x1xf32, #tpu.memory_space<vmem>>, vector<16x1xf32>,
    %c0_6 = arith.constant 0 : index
    %c0_7 = arith.constant 0 : index
    %9 = vector.load %arg3[%c0_6, %c0_7] : memref<16x1xf32, #tpu.memory_space<vmem>>, vector<16x1xf32>
    %10 = arith.mulf %3, %3 : vector<16x128xf32>
    %cst_8 = arith.constant dense<0.000000e+00> : vector<16xf32>
    %11 = vector.multi_reduction <add>, %10, %cst_8 [1] : vector<16x128xf32> to vector<16xf32>
    %12 = vector.shape_cast %11 : vector<16xf32> to vector<16x1xf32>
    %13 = arith.addf %9, %12 : vector<16x1xf32>
    %c0_9 = arith.constant 0 : index
    %c0_10 = arith.constant 0 : index
    %14 = vector.load %arg3[%c0_9, %c0_10] : memref<16x1xf32, #tpu.memory_space<vmem>>, vector<16x1xf32>
    tpu.vector_store %arg3[%c0_9, %c0_10], %13 {strides = array<i32>} : memref<16x1xf32, #tpu.memory_space<vmem>>, vector<16x1xf32>,
    %c0_i32_11 = arith.constant 0 : i32
    %15 = arith.cmpi eq, %arg0, %c0_i32_11 : i32
    %16 = arith.extui %15 : i1 to i32
    %c0_i32_12 = arith.constant 0 : i32
    %17 = arith.cmpi ne, %16, %c0_i32_12 : i32
    scf.if %17 {
      %c0_13 = arith.constant 0 : index
      %c0_14 = arith.constant 0 : index
      %18 = vector.load %arg2[%c0_13, %c0_14] : memref<16x1xf32, #tpu.memory_space<vmem>>, vector<16x1xf32>
      %cst_15 = arith.constant 1.250000e-01 : f32
      %19 = vector.broadcast %cst_15 : f32 to vector<16x1xf32>
      %20 = arith.mulf %18, %19 : vector<16x1xf32>
      %c0_16 = arith.constant 0 : index
      %c0_17 = arith.constant 0 : index
      %21 = vector.load %arg3[%c0_16, %c0_17] : memref<16x1xf32, #tpu.memory_space<vmem>>, vector<16x1xf32>
      %cst_18 = arith.constant 1.250000e-01 : f32
      %22 = vector.broadcast %cst_18 : f32 to vector<16x1xf32>
      %23 = arith.mulf %21, %22 : vector<16x1xf32>
      %24 = arith.mulf %20, %20 : vector<16x1xf32>
      %25 = arith.subf %23, %24 : vector<16x1xf32>
      %c0_19 = arith.constant 0 : index
      %c0_20 = arith.constant 0 : index
      %26 = vector.load %arg2[%c0_19, %c0_20] : memref<16x1xf32, #tpu.memory_space<vmem>>, vector<16x1xf32>
      tpu.vector_store %arg2[%c0_19, %c0_20], %20 {strides = array<i32>} : memref<16x1xf32, #tpu.memory_space<vmem>>, vector<16x1xf32>,
      %cst_21 = arith.constant 0.000000e+00 : f32
      %27 = vector.broadcast %cst_21 : f32 to vector<16x1xf32>
      %28 = arith.maximumf %25, %27 : vector<16x1xf32>
      %cst_22 = arith.constant 9.99999974E-6 : f32
      %29 = vector.broadcast %cst_22 : f32 to vector<16x1xf32>
      %30 = arith.addf %28, %29 : vector<16x1xf32>
      %31 = math.rsqrt %30 : vector<16x1xf32>
      %c0_23 = arith.constant 0 : index
      %c0_24 = arith.constant 0 : index
      %32 = vector.load %arg3[%c0_23, %c0_24] : memref<16x1xf32, #tpu.memory_space<vmem>>, vector<16x1xf32>
      tpu.vector_store %arg3[%c0_23, %c0_24], %31 {strides = array<i32>} : memref<16x1xf32, #tpu.memory_space<vmem>>, vector<16x1xf32>,
    } else {
    }
    return
  }
  func.func @transform_0(%arg0: i32) -> (i32, i32) {
    %c0_i32 = arith.constant 0 : i32
    %c0_i32_0 = arith.constant 0 : i32
    return %c0_i32, %arg0 : i32, i32
  }
  func.func @transform_1(%arg0: i32) -> (i32, i32) {
    %c0_i32 = arith.constant 0 : i32
    %c0_i32_0 = arith.constant 0 : i32
    %c0_i32_1 = arith.constant 0 : i32
    return %c0_i32, %c0_i32_0 : i32, i32
  }
  func.func @transform_2(%arg0: i32) -> (i32, i32) {
    %c0_i32 = arith.constant 0 : i32
    %c0_i32_0 = arith.constant 0 : i32
    %c0_i32_1 = arith.constant 0 : i32
    return %c0_i32, %c0_i32_0 : i32, i32
  }
}

</mosaic_0001>

<llo_original>
// kernel: tpu_custom_call.1
$region0: #{tpu_custom_call.1}
  #allocation0 [shape = 'u32[]', space=smem, size = 0x4, offset = 0x4, fixed_abs, tag = 'smem constant byte address 0x4 - core index']
  #allocation1 [shape = 'u32[72,128]{1,0:T(1,128)}', space=vmem, size = 0x9000, scoped, tag = 'internal scratch']
  %s0 = inlined_call_operand.hbm [shape: f32[24,128], index: 0, kind: input, shape index: {}]
  %s1 = inlined_call_operand.vmem [shape: f32[16,1], index: 1, kind: output, shape index: {0}]
  %s2 = inlined_call_operand.vmem [shape: f32[16,1], index: 2, kind: output, shape index: {1}]
  %3 = xla_tuple %s1, %s2
  %s4 = sld [smem:[#allocation0]]
  $region34: #{tpu_custom_call.1} parent=0
    _
  %s6 = ssub.s32 1, %s4
  %s7 = scalar_select 0, %s6, %s4
  $region1: #{tpu_custom_call.1} parent=0
    #allocation2 [shape = 'u8[12288]{0}', space=vmem, size = 0x3000, scoped, tag = 'input window, operand 0, single buffered']
    #allocation3 [shape = 's32[1]{0}', space=sflag, size = 0x4, scoped, tag = 'scoped memory for tpu_custom_call.1']
    %8 = vsyncpa [#allocation3], 0
    // Predicated region
    $region2: #{tpu_custom_call.1} parent=1 // pred_check
      _
    $region3: #{tpu_custom_call.1} parent=1 // pred_check_branch
      %10 = sbr.rel (0) target = $region5
    $region4: #{tpu_custom_call.1} parent=1 // pred_region
      %12 = vsyncadd [#allocation3], 0
      %s13 = sshll.u32 %s0, 4
      %s14 = int_to_ptr.hbm [resolvable:$true] %s13
      %s15 = sshll.u32 [#allocation2], 4
      %s16 = int_to_ptr.vmem [resolvable:$true] %s15
      %21 = dma.hbm_to_vmem [thread:$0]  %s14, 384, %s16, [#allocation3], 128, 128, 8
    $region5: #{tpu_custom_call.1} parent=1 // pred_fallthru
      _
    // Predicated region
    $region6: #{tpu_custom_call.1} parent=1 // pred_check
      _
    $region7: #{tpu_custom_call.1} parent=1 // pred_check_branch
      %23 = sbr.rel (0) target = $region9
    $region8: #{tpu_custom_call.1} parent=1 // pred_region
      %25 = dma.done [#allocation3], 384
    $region9: #{tpu_custom_call.1} parent=1 // pred_fallthru
      _
    %p26 = scmp.eq.s32.totalorder 0, 0
    // Predicated region
    $region10: #{tpu_custom_call.1} parent=1 // pred_check
      %p27 = pneg %p26
    $region11: #{tpu_custom_call.1} parent=1 // pred_check_branch
      %29 = sbr.rel (%p27) target = $region13
    $region12: #{tpu_custom_call.1} parent=1 // pred_region
      %vm30 = vcmask 7168
      %31 = vst.msk [vmem:[%s1] sm:$0xff] %vm30, 0.0
      %32 = vst.msk [vmem:[%s1 + $0x8] sm:$0xff] %vm30, 0.0
      %33 = vst.msk [vmem:[%s2] sm:$0xff] %vm30, 0.0
      %34 = vst.msk [vmem:[%s2 + $0x8] sm:$0xff] %vm30, 0.0
    $region13: #{tpu_custom_call.1} parent=1 // pred_fallthru
      _
    %v35 = vld [vmem:[#allocation2] sm:$0xff]
    %v36 = vld [vmem:[#allocation2 + $0x8] sm:$0xff]
    %v37 = vld [vmem:[%s1] sm:$0xff]
    %v38 = vld [vmem:[%s1 + $0x8] sm:$0xff]
    %39 = vadd.xlane.f32.xlu0 %v35
    %v40 = vpop.xlane.xlu0 %39
    %41 = vadd.xlane.f32.xlu0 %v36
    %v42 = vpop.xlane.xlu0 %41
    %v43 = vadd.f32 %v37, %v40
    %v44 = vadd.f32 %v38, %v42
    %vm45 = vcmask 7168
    %46 = vst.msk [vmem:[%s1] sm:$0xff] %vm45, %v43
    %47 = vst.msk [vmem:[%s1 + $0x8] sm:$0xff] %vm45, %v44
    %v48 = vld [vmem:[%s2] sm:$0xff]
    %v49 = vld [vmem:[%s2 + $0x8] sm:$0xff]
    %v50 = vmul.f32 %v35, %v35
    %v51 = vmul.f32 %v36, %v36
    %52 = vadd.xlane.f32.xlu0 %v50
    %v53 = vpop.xlane.xlu0 %52
    %54 = vadd.xlane.f32.xlu0 %v51
    %v55 = vpop.xlane.xlu0 %54
    %v56 = vadd.f32 %v48, %v53
    %v57 = vadd.f32 %v49, %v55
    %58 = vst.msk [vmem:[%s2] sm:$0xff] %vm45, %v56
    %59 = vst.msk [vmem:[%s2 + $0x8] sm:$0xff] %vm45, %v57
    // Predicated region
    $region14: #{tpu_custom_call.1} parent=1 // pred_check
      %p60 = pneg %p26
    $region15: #{tpu_custom_call.1} parent=1 // pred_check_branch
      %62 = sbr.rel (%p60) target = $region17
    $region16: #{tpu_custom_call.1} parent=1 // pred_region
      %v63 = vld [vmem:[%s1] sm:$0xff]
      %v64 = vld [vmem:[%s1 + $0x8] sm:$0xff]
      %v65 = vmul.f32 %v63, 0.125
      %v66 = vmul.f32 %v64, 0.125
      %v67 = vld [vmem:[%s2] sm:$0xff]
      %v68 = vld [vmem:[%s2 + $0x8] sm:$0xff]
      %v69 = vmul.f32 %v67, 0.125
      %v70 = vmul.f32 %v68, 0.125
      %v71 = vmul.f32 %v65, %v65
      %v72 = vmul.f32 %v66, %v66
      %v73 = vsub.f32 %v69, %v71
      %v74 = vsub.f32 %v70, %v72
      %75 = vst.msk [vmem:[%s1] sm:$0xff] %vm45, %v65
      %76 = vst.msk [vmem:[%s1 + $0x8] sm:$0xff] %vm45, %v66
      %v77 = vmax.f32 %v73, 0.0
      %v78 = vmax.f32 %v74, 0.0
      %v79 = vadd.f32 %v77, 1e-05
      %v80 = vadd.f32 %v78, 1e-05
      %v81 = vrsqrt.pop %v79
      %v82 = vmul.f32 %v81, %v79
      %v83 = vmul.f32 %v82, %v81
      %v84 = vmul.f32 0.5, %v83
      %v85 = vsub.f32 1.5, %v84
      %v86 = vmul.f32 %v81, %v85
      %vm87 = vweird.f32 %v79
      %vm88 = vweird.f32 %v81
      %vm89 = vmor %vm87, %vm88
      %v90 = vsel %vm89, %v81, %v86
      %v91 = vrsqrt.pop %v80
      %v92 = vmul.f32 %v91, %v80
      %v93 = vmul.f32 %v92, %v91
      %v94 = vmul.f32 0.5, %v93
      %v95 = vsub.f32 1.5, %v94
      %v96 = vmul.f32 %v91, %v95
      %vm97 = vweird.f32 %v80
      %vm98 = vweird.f32 %v91
      %vm99 = vmor %vm97, %vm98
      %v100 = vsel %vm99, %v91, %v96
      %101 = vst.msk [vmem:[%s2] sm:$0xff] %vm45, %v90
      %102 = vst.msk [vmem:[%s2 + $0x8] sm:$0xff] %vm45, %v100
    $region17: #{tpu_custom_call.1} parent=1 // pred_fallthru
      _
    // Predicated region
    $region18: #{tpu_custom_call.1} parent=1 // pred_check
      _
    $region19: #{tpu_custom_call.1} parent=1 // pred_check_branch
      %104 = sbr.rel (0) target = $region21
    $region20: #{tpu_custom_call.1} parent=1 // pred_region
      _
    $region21: #{tpu_custom_call.1} parent=1 // pred_fallthru
      _
    // Predicated region
    $region22: #{tpu_custom_call.1} parent=1 // pred_check
      _
    $region23: #{tpu_custom_call.1} parent=1 // pred_check_branch
      %106 = sbr.rel (0) target = $region25
    $region24: #{tpu_custom_call.1} parent=1 // pred_region
      _
    $region25: #{tpu_custom_call.1} parent=1 // pred_fallthru
      _
    // Predicated region
    $region26: #{tpu_custom_call.1} parent=1 // pred_check
      _
    $region27: #{tpu_custom_call.1} parent=1 // pred_check_branch
      %108 = sbr.rel (0) target = $region29
    $region28: #{tpu_custom_call.1} parent=1 // pred_region
      _
    $region29: #{tpu_custom_call.1} parent=1 // pred_fallthru
      _
    // Predicated region
    $region30: #{tpu_custom_call.1} parent=1 // pred_check
      _
    $region31: #{tpu_custom_call.1} parent=1 // pred_check_branch
      %110 = sbr.rel (0) target = $region33
    $region32: #{tpu_custom_call.1} parent=1 // pred_region
      _
    $region33: #{tpu_custom_call.1} parent=1 // pred_fallthru
      _
    %111 = vsyncpa [#allocation3], 1

</llo_original>
